<compile_context>
chip_gen: v6e
topology: v6e:2x2x1
jax: 0.10.0
libtpu: 0.0.40
codegen_flags: <defaults>
</compile_context>

<pallas_src>
import functools
import math

import jax
import jax.numpy as jnp
from jax import lax
from jax.experimental import pallas as pl
from jax.experimental.pallas import tpu as pltpu

MIN_NORM = 1e-15      # reference self.min_norm (norm floors)
PROJ_EPS = 1e-5       # boundary eps used by e.proj_() (clip back strictly inside the ball)
CLIP_EPS = 1e-15      # acos/asin arg clip; in f32 the bounds round to exactly +/-1.0 (= torch clamp)
TINY = 1e-30          # floor for squared quantities (~ MIN_NORM**2)

_LANE_TILE_CAP = 1024                    # 512-1024 lane tiles already saturate ~85% of HBM roofline
_VMEM_BLOCK_BUDGET = 6 * 1024 * 1024     # target bytes per in-flight block set (x2 double-buffer)
_VMEM_HARD_CAP = 40 * 1024 * 1024        # never request more scoped VMEM than this (v7x has 64 MiB)


def _round_up(x, m):
    return ((x + m - 1) // m) * m


def _per_lane_bytes(dim, n_items, itemsize=4):
    """VMEM bytes per lane for one block set: the (D, N, tile) input block (N pads to 8
    sublanes) plus the two (N, tile) f32 output blocks."""
    n_pad = _round_up(max(n_items, 1), 8)
    return dim * n_pad * itemsize + 2 * n_pad * 4


def _pick_lane_tile(batch, per_lane_bytes, cap=_LANE_TILE_CAP):
    """Lane-axis tile: a multiple of 128 that (a) stays <= cap (512-1024 is the knee of the
    measured tile curve), (b) keeps the double-buffered block set within the VMEM budget, and
    (c) leaves >= ~8 grid steps for large batches so v7x's two TensorCores each get >= 4
    pipelined steps on the 'parallel' batch axis (on v5e/v6e extra steps just feed the
    software pipeline)."""
    vmem_tile = (_VMEM_BLOCK_BUDGET // max(per_lane_bytes, 1)) // 128 * 128
    steps_tile = _round_up(max(pl.cdiv(batch, 8), 1), 128)
    return max(128, min(cap, max(vmem_tile, 128), steps_tile))


def _cone_kernel(e_ref, cos_ref, sin_ref, *, curvature, level, anchor_is_parent):
    """Lanes = batch pairs, sublanes = tuple slot, major axis = embedding dim.

    e_ref:   (D, N, tb)  gathered tuple embeddings; slot 0 is the tuple's anchor entry.
    cos_ref: (N, tb)     cos(angle(parent, child))   (row 0 is a discarded self-pair row)
    sin_ref: (N, tb)     sin(half_aperture(parent))  (row 0 discarded likewise)
    """
    cc = abs(curvature)
    sqrt_c = cc ** 0.5
    max_norm = (1.0 - PROJ_EPS) / sqrt_c             # e.proj_() ball radius
    max_sq = max_norm * max_norm
    K = level * sqrt_c / (1.0 - cc * level * level)  # half-aperture constant
    lo, hi = -1.0 + CLIP_EPS, 1.0 - CLIP_EPS         # rounds to exactly +/-1.0 in f32

    e = e_ref[...].astype(jnp.float32)               # (D, N, tb)
    a = e[:, 0:1, :]                                 # (D, 1, tb)  anchor slot (aligned slice)

    # One squared-norm / anchor-dot reduction per slot over the embedding (major) axis.
    sq_raw = jnp.sum(e * e, axis=0)                  # (N, tb)  |v|^2
    dot_raw = jnp.sum(a * e, axis=0)                 # (N, tb)  <anchor, v>

    # e.proj_() applied to the *reduced* quantities: clip |v|^2 into the ball and rescale
    # the dot by the two implied per-vector scales (equivalent to clipping the vectors).
    scale = jnp.where(sq_raw > max_sq,
                      max_norm * lax.rsqrt(jnp.maximum(sq_raw, TINY)), 1.0)
    sq = jnp.minimum(sq_raw, max_sq)                 # (N, tb)
    a_sq = sq[0:1, :]                                # (1, tb)
    a_scale = scale[0:1, :]                          # (1, tb)
    dot = dot_raw * (a_scale * scale)                # (N, tb)

    if anchor_is_parent:
        p_sq, x_sq = a_sq, sq                        # parent = anchor (broadcasts over slots)
    else:
        p_sq, x_sq = sq, a_sq                        # reverse=True: the other slots are parents

    # sin(half_aperture(p)) = K (1 - c|p|^2) / (sqrt_c |p|)
    p_norm_c = jnp.maximum(jnp.sqrt(cc * p_sq), MIN_NORM)           # sqrt_c * |p|, floored
    sin_half = jnp.clip(K * (1.0 - cc * p_sq) / p_norm_c, lo, hi)

    # cos(angle(p, x)); per-factor sqrt with min-norm floors (no product underflow).
    diff_sq = jnp.maximum(p_sq + x_sq - 2.0 * dot, 0.0)             # |p - x|^2
    gamma = jnp.maximum(1.0 + cc * cc * p_sq * x_sq - 2.0 * cc * dot, TINY)
    num = cc * dot * (1.0 + cc * p_sq) - cc * p_sq * (1.0 + cc * x_sq)
    den = p_norm_c * jnp.maximum(jnp.sqrt(cc * diff_sq), MIN_NORM) * jnp.sqrt(gamma)
    cos_angle = jnp.clip(num / jnp.maximum(den, MIN_NORM), lo, hi)

    # Lane-dense full-block stores (single unmasked vst per output).
    cos_ref[...] = jnp.broadcast_to(cos_angle, cos_ref.shape)
    sin_ref[...] = jnp.broadcast_to(sin_half, sin_ref.shape)


def cone_angle_energy(e_t, *, curvature, level, anchor_is_parent=True, tile_b=None):
    """e_t: (D, N, B) f32 gathered tuple embeddings (slot 0 = anchor) with the batch on the
    minor/lane axis. Returns the angle energy (N-1, B) f32."""
    D, N, B = e_t.shape
    assert N >= 2, "need at least one (anchor, other) pair"

    per_lane = _per_lane_bytes(D, N)
    if tile_b is None:
        tile_b = _pick_lane_tile(B, per_lane)
    b_pad = _round_up(B, tile_b)
    if b_pad != B:
        # Fallback only: HyperbolicConePallas.forward pads the *index* array instead, so the
        # gather already emits lane-aligned data and this float pad copy never runs.
        e_t = jnp.pad(e_t, ((0, 0), (0, 0), (0, b_pad - B)))

    block_bytes = per_lane * tile_b
    vmem_need = 3 * block_bytes + (4 << 20)          # double-buffered blocks + working values + slack
    if vmem_need > _VMEM_HARD_CAP:
        # TODO(synk): for very large D*N, split the embedding dim into an 'arbitrary' grid axis
        # with VMEM scratch accumulators for sq/dot instead of refusing.
        raise ValueError(
            f"HyperbolicCone block set needs ~{vmem_need / 2**20:.1f} MiB of VMEM "
            f"(> {_VMEM_HARD_CAP >> 20} MiB cap); reduce dim or tuple size.")
    vmem_limit = int(max(vmem_need, 16 << 20))

    kernel = functools.partial(_cone_kernel, curvature=curvature, level=level,
                               anchor_is_parent=anchor_is_parent)
    cos_a, sin_h = pl.pallas_call(
        kernel,
        out_shape=(jax.ShapeDtypeStruct((N, b_pad), jnp.float32),
                   jax.ShapeDtypeStruct((N, b_pad), jnp.float32)),
        grid=(b_pad // tile_b,),
        in_specs=[pl.BlockSpec((D, N, tile_b), lambda i: (0, 0, i))],
        out_specs=(pl.BlockSpec((N, tile_b), lambda i: (0, i)),
                   pl.BlockSpec((N, tile_b), lambda i: (0, i))),
        compiler_params=pltpu.CompilerParams(
            dimension_semantics=("parallel",),         # batch axis: shards across v7x's 2 TCs
            vmem_limit_bytes=vmem_limit),
    )(e_t)

    # TODO(synk): arccos/arcsin stay in JAX glue (Mosaic lowering for acos/asin is not
    # guaranteed); they only touch the small lane-dense (N, B) results -- all dim reductions
    # and the rational-function math run inside the kernel.
    angle = jnp.arccos(cos_a[1:, :B])
    half_aperture = jnp.arcsin(sin_h[1:, :B])
    return angle - half_aperture


def _reference_energy(weight, idx, curvature, level, reverse=False):
    """Pure-JAX reference for the same angle-energy formula (validates kernel plumbing)."""
    cc = abs(curvature)
    sqrt_c = cc ** 0.5
    max_norm = (1.0 - PROJ_EPS) / sqrt_c
    lo, hi = -1.0 + CLIP_EPS, 1.0 - CLIP_EPS
    K = level * sqrt_c / (1.0 - cc * level * level)

    e = weight[idx]                                                  # (B, N, D)
    nrm = jnp.linalg.norm(e, axis=-1, keepdims=True)
    e = jnp.where(nrm > max_norm, e / jnp.maximum(nrm, MIN_NORM) * max_norm, e)   # e.proj_()
    p2 = e[:, 1:, :]
    p1 = jnp.broadcast_to(e[:, :1, :], p2.shape)
    parent, child = (p2, p1) if reverse else (p1, p2)

    p_sq = jnp.sum(parent * parent, axis=-1)
    x_sq = jnp.sum(child * child, axis=-1)
    dot = jnp.sum(parent * child, axis=-1)
    p_norm_c = jnp.maximum(jnp.sqrt(cc * p_sq), MIN_NORM)
    sin_half = jnp.clip(K * (1.0 - cc * p_sq) / p_norm_c, lo, hi)
    diff_sq = jnp.maximum(p_sq + x_sq - 2.0 * dot, 0.0)
    gamma = jnp.maximum(1.0 + cc * cc * p_sq * x_sq - 2.0 * cc * dot, TINY)
    num = cc * dot * (1.0 + cc * p_sq) - cc * p_sq * (1.0 + cc * x_sq)
    den = p_norm_c * jnp.maximum(jnp.sqrt(cc * diff_sq), MIN_NORM) * jnp.sqrt(gamma)
    cos_angle = jnp.clip(num / jnp.maximum(den, MIN_NORM), lo, hi)
    energy = jnp.arccos(cos_angle) - jnp.arcsin(sin_half)            # (B, N-1)
    if energy.shape[-1] == 1:
        energy = energy.reshape(energy.shape[0])
    return energy


class HyperbolicConePallas:
    """JAX/Pallas port of HyperbolicCone(source='origin', energy_type='angle') forward."""

    def __init__(self, source, radius, size, dim, curvature, margin, sub_apex_dist,
                 energy_type, key, sparse=False):
        assert source == 'origin' and energy_type == 'angle'
        del sparse  # embedding sparsity is a torch optimizer detail, irrelevant here
        self.curvature = curvature
        self.margin = margin
        self.sub_apex_dist = sub_apex_dist
        self.dim = dim
        sqrt_c = abs(curvature) ** 0.5
        # self.level = (tanh(0.5*sqrt_c*radius) + 0.01) / sqrt_c
        self.level = (math.tanh(0.5 * sqrt_c * radius) + 0.01) / sqrt_c
        # emb.weight.init_weights(irange=1e-05): uniform(-1e-5, 1e-5)
        w = jax.random.uniform(key, (size, dim), jnp.float32, minval=-1e-5, maxval=1e-5)
        # proj_away: points with norm < level are pushed out onto the sphere of radius `level`
        norm = jnp.maximum(jnp.linalg.norm(w, axis=-1, keepdims=True), MIN_NORM)
        w = jnp.where(norm < self.level, w / norm * self.level, w)
        self.weight = w                    # (size, dim) -- reference layout (used by tests)
        # Transposed (dim, size) copy so the forward() gather lands the batch directly on the
        # lane (minor) axis: no lane/sublane transposes of the N*D*B payload before the kernel.
        self.weight_T = w.T

    def forward(self, inputs, reverse=False):
        B, N = inputs.shape
        assert N >= 2
        D = self.dim

        # Lane-align the batch by padding the *index* array (cheap int copy): the float
        # payload is gathered directly into its aligned shape, never padded/copied.
        tile_b = _pick_lane_tile(B, _per_lane_bytes(D, N))
        b_pad = _round_up(B, tile_b)
        idx = inputs
        if b_pad != B:
            idx = jnp.concatenate(
                [idx, jnp.zeros((b_pad - B, N), dtype=idx.dtype)], axis=0)

        # Single gather along weight_T's minor axis: batch -> lanes, tuple slot -> sublanes,
        # embedding dim -> major axis. No transposes of the gathered payload.
        # TODO(synk): for large D (row >= ~2 KiB) fuse this gather into the kernel via
        # PrefetchScalarGridSpec + pl.ANY weights + manual make_async_copy per row.
        e_t = jnp.take(self.weight_T, idx.T, axis=1)                 # (D, N, b_pad)

        # reverse=False: parent = anchor (slot 0), children = slots 1..N-1; reverse swaps roles.
        energy = cone_angle_energy(e_t, curvature=self.curvature, level=self.level,
                                   anchor_is_parent=not reverse, tile_b=tile_b)  # (N-1, b_pad)
        energy = energy[:, :B].T                                     # (B, N-1)
        if N - 1 == 1:                                               # torch .squeeze(-1)
            energy = energy.reshape(B)
        return energy


if __name__ == "__main__":
    key = jax.random.PRNGKey(0)
    k_emb, k_idx = jax.random.split(key)

    size, dim = 50, 32          # vocab size, embedding dim
    batch, num_items = 2, 4     # [anchor, pos, neg, neg]

    model = HyperbolicConePallas(
        source='origin', radius=0.1, size=size, dim=dim,
        curvature=-1.0, margin=0.01, sub_apex_dist=0.1,
        energy_type='angle', key=k_emb)

    # Deterministic, distinct indices per tuple (no degenerate parent == child pairs,
    # which are ill-conditioned for a numerical reference comparison).
    perm = jax.random.permutation(k_idx, size)[: batch * num_items]
    inputs = perm.reshape(batch, num_items).astype(jnp.int32)

    energy = jax.block_until_ready(model.forward(inputs))
    assert energy.shape == (batch, num_items - 1)
    assert bool(jnp.all(jnp.isfinite(energy)))

    # also exercise the reverse branch (children treated as parents)
    energy_rev = jax.block_until_ready(model.forward(inputs, reverse=True))
    assert energy_rev.shape == (batch, num_items - 1)
    assert bool(jnp.all(jnp.isfinite(energy_rev)))

    # Pure-JAX reference check. Tolerance is loose because freshly initialized embeddings sit
    # exactly on the half-aperture boundary (sin ~ 1.0), where arcsin amplifies f32 ulp-level
    # reduction-order differences to ~1e-3.
    ref = _reference_energy(model.weight, inputs, model.curvature, model.level, reverse=False)
    ref_rev = _reference_energy(model.weight, inputs, model.curvature, model.level, reverse=True)
    assert bool(jnp.allclose(energy, ref, rtol=1e-3, atol=5e-3))
    assert bool(jnp.allclose(energy_rev, ref_rev, rtol=1e-3, atol=5e-3))

    print("KERNEL_OK")
</pallas_src>

<mosaic_0001>
module attributes {stable_mosaic.version = 11 : i64} {
  func.func @_cone_kernel(%arg0: i32, %arg1: memref<32x4x128xf32, #tpu.memory_space<vmem>>, %arg2: memref<4x128xf32, #tpu.memory_space<vmem>>, %arg3: memref<4x128xf32, #tpu.memory_space<vmem>>) attributes {dimension_semantics = [#tpu.dimension_semantics<parallel>], iteration_bounds = array<i64: 1>, scalar_prefetch = 0 : i64, scratch_operands = 0 : i64, tpu.core_type = #tpu.core_type<tc>, window_params = [{transform_indices = @transform_0, window_bounds = array<i64: 32, 4, 128>}, {transform_indices = @transform_1, window_bounds = array<i64: 4, 128>}, {transform_indices = @transform_2, window_bounds = array<i64: 4, 128>}]} {
    %c0 = arith.constant 0 : index
    %c0_0 = arith.constant 0 : index
    %c0_1 = arith.constant 0 : index
    %0 = vector.load %arg1[%c0, %c0_0, %c0_1] : memref<32x4x128xf32, #tpu.memory_space<vmem>>, vector<32x4x128xf32>
    %1 = vector.extract_strided_slice %0 {offsets = [0, 0, 0], sizes = [32, 1, 128], strides = [1, 1, 1]} : vector<32x4x128xf32> to vector<32x1x128xf32>
    %2 = arith.mulf %0, %0 : vector<32x4x128xf32>
    %cst = arith.constant dense<0.000000e+00> : vector<4x128xf32>
    %3 = vector.multi_reduction <add>, %2, %cst [0] : vector<32x4x128xf32> to vector<4x128xf32>
    %4 = vector.broadcast %1 : vector<32x1x128xf32> to vector<32x4x128xf32>
    %5 = arith.mulf %4, %0 : vector<32x4x128xf32>
    %cst_2 = arith.constant dense<0.000000e+00> : vector<4x128xf32>
    %6 = vector.multi_reduction <add>, %5, %cst_2 [0] : vector<32x4x128xf32> to vector<4x128xf32>
    %cst_3 = arith.constant 0.999979972 : f32
    %7 = vector.broadcast %cst_3 : f32 to vector<4x128xf32>
    %8 = arith.cmpf ogt, %3, %7 : vector<4x128xf32>
    %cst_4 = arith.constant 1.000000e-30 : f32
    %9 = vector.broadcast %cst_4 : f32 to vector<4x128xf32>
    %10 = arith.maximumf %3, %9 : vector<4x128xf32>
    %11 = math.rsqrt %10 : vector<4x128xf32>
    %cst_5 = arith.constant 0.999989986 : f32
    %12 = vector.broadcast %cst_5 : f32 to vector<4x128xf32>
    %13 = arith.mulf %12, %11 : vector<4x128xf32>
    %cst_6 = arith.constant 1.000000e+00 : f32
    %14 = vector.broadcast %cst_6 : f32 to vector<4x128xf32>
    %15 = arith.select %8, %13, %14 : vector<4x128xi1>, vector<4x128xf32>
    %cst_7 = arith.constant 0.999979972 : f32
    %16 = vector.broadcast %cst_7 : f32 to vector<4x128xf32>
    %17 = arith.minimumf %3, %16 : vector<4x128xf32>
    %18 = vector.extract_strided_slice %17 {offsets = [0, 0], sizes = [1, 128], strides = [1, 1]} : vector<4x128xf32> to vector<1x128xf32>
    %19 = vector.extract_strided_slice %15 {offsets = [0, 0], sizes = [1, 128], strides = [1, 1]} : vector<4x128xf32> to vector<1x128xf32>
    %20 = vector.broadcast %19 : vector<1x128xf32> to vector<4x128xf32>
    %21 = arith.mulf %20, %15 : vector<4x128xf32>
    %22 = arith.mulf %6, %21 : vector<4x128xf32>
    %cst_8 = arith.constant 1.000000e+00 : f32
    %23 = vector.broadcast %cst_8 : f32 to vector<1x128xf32>
    %24 = arith.mulf %23, %18 : vector<1x128xf32>
    %25 = math.sqrt %24 : vector<1x128xf32>
    %cst_9 = arith.constant 1.000000e-15 : f32
    %26 = vector.broadcast %cst_9 : f32 to vector<1x128xf32>
    %27 = arith.maximumf %25, %26 : vector<1x128xf32>
    %cst_10 = arith.constant 1.000000e+00 : f32
    %28 = vector.broadcast %cst_10 : f32 to vector<1x128xf32>
    %29 = arith.mulf %28, %18 : vector<1x128xf32>
    %cst_11 = arith.constant 1.000000e+00 : f32
    %30 = vector.broadcast %cst_11 : f32 to vector<1x128xf32>
    %31 = arith.subf %30, %29 : vector<1x128xf32>
    %cst_12 = arith.constant 0.0601747035 : f32
    %32 = vector.broadcast %cst_12 : f32 to vector<1x128xf32>
    %33 = arith.mulf %32, %31 : vector<1x128xf32>
    %34 = arith.divf %33, %27 : vector<1x128xf32>
    %cst_13 = arith.constant -1.000000e+00 : f32
    %cst_14 = arith.constant 1.000000e+00 : f32
    %35 = vector.broadcast %cst_13 : f32 to vector<1x128xf32>
    %36 = arith.maximumf %35, %34 : vector<1x128xf32>
    %37 = vector.broadcast %cst_14 : f32 to vector<1x128xf32>
    %38 = arith.minimumf %37, %36 : vector<1x128xf32>
    %39 = vector.broadcast %18 : vector<1x128xf32> to vector<4x128xf32>
    %40 = arith.addf %39, %17 : vector<4x128xf32>
    %cst_15 = arith.constant 2.000000e+00 : f32
    %41 = vector.broadcast %cst_15 : f32 to vector<4x128xf32>
    %42 = arith.mulf %41, %22 : vector<4x128xf32>
    %43 = arith.subf %40, %42 : vector<4x128xf32>
    %cst_16 = arith.constant 0.000000e+00 : f32
    %44 = vector.broadcast %cst_16 : f32 to vector<4x128xf32>
    %45 = arith.maximumf %43, %44 : vector<4x128xf32>
    %cst_17 = arith.constant 1.000000e+00 : f32
    %46 = vector.broadcast %cst_17 : f32 to vector<1x128xf32>
    %47 = arith.mulf %46, %18 : vector<1x128xf32>
    %48 = vector.broadcast %47 : vector<1x128xf32> to vector<4x128xf32>
    %49 = arith.mulf %48, %17 : vector<4x128xf32>
    %cst_18 = arith.constant 1.000000e+00 : f32
    %50 = vector.broadcast %cst_18 : f32 to vector<4x128xf32>
    %51 = arith.addf %50, %49 : vector<4x128xf32>
    %cst_19 = arith.constant 2.000000e+00 : f32
    %52 = vector.broadcast %cst_19 : f32 to vector<4x128xf32>
    %53 = arith.mulf %52, %22 : vector<4x128xf32>
    %54 = arith.subf %51, %53 : vector<4x128xf32>
    %cst_20 = arith.constant 1.000000e-30 : f32
    %55 = vector.broadcast %cst_20 : f32 to vector<4x128xf32>
    %56 = arith.maximumf %54, %55 : vector<4x128xf32>
    %cst_21 = arith.constant 1.000000e+00 : f32
    %57 = vector.broadcast %cst_21 : f32 to vector<4x128xf32>
    %58 = arith.mulf %57, %22 : vector<4x128xf32>
    %cst_22 = arith.constant 1.000000e+00 : f32
    %59 = vector.broadcast %cst_22 : f32 to vector<1x128xf32>
    %60 = arith.mulf %59, %18 : vector<1x128xf32>
    %cst_23 = arith.constant 1.000000e+00 : f32
    %61 = vector.broadcast %cst_23 : f32 to vector<1x128xf32>
    %62 = arith.addf %61, %60 : vector<1x128xf32>
    %63 = vector.broadcast %62 : vector<1x128xf32> to vector<4x128xf32>
    %64 = arith.mulf %58, %63 : vector<4x128xf32>
    %cst_24 = arith.constant 1.000000e+00 : f32
    %65 = vector.broadcast %cst_24 : f32 to vector<1x128xf32>
    %66 = arith.mulf %65, %18 : vector<1x128xf32>
    %cst_25 = arith.constant 1.000000e+00 : f32
    %67 = vector.broadcast %cst_25 : f32 to vector<4x128xf32>
    %68 = arith.mulf %67, %17 : vector<4x128xf32>
    %cst_26 = arith.constant 1.000000e+00 : f32
    %69 = vector.broadcast %cst_26 : f32 to vector<4x128xf32>
    %70 = arith.addf %69, %68 : vector<4x128xf32>
    %71 = vector.broadcast %66 : vector<1x128xf32> to vector<4x128xf32>
    %72 = arith.mulf %71, %70 : vector<4x128xf32>
    %73 = arith.subf %64, %72 : vector<4x128xf32>
    %cst_27 = arith.constant 1.000000e+00 : f32
    %74 = vector.broadcast %cst_27 : f32 to vector<4x128xf32>
    %75 = arith.mulf %74, %45 : vector<4x128xf32>
    %76 = math.sqrt %75 : vector<4x128xf32>
    %cst_28 = arith.constant 1.000000e-15 : f32
    %77 = vector.broadcast %cst_28 : f32 to vector<4x128xf32>
    %78 = arith.maximumf %76, %77 : vector<4x128xf32>
    %79 = vector.broadcast %27 : vector<1x128xf32> to vector<4x128xf32>
    %80 = arith.mulf %79, %78 : vector<4x128xf32>
    %81 = math.sqrt %56 : vector<4x128xf32>
    %82 = arith.mulf %80, %81 : vector<4x128xf32>
    %cst_29 = arith.constant 1.000000e-15 : f32
    %83 = vector.broadcast %cst_29 : f32 to vector<4x128xf32>
    %84 = arith.maximumf %82, %83 : vector<4x128xf32>
    %85 = arith.divf %73, %84 : vector<4x128xf32>
    %cst_30 = arith.constant -1.000000e+00 : f32
    %cst_31 = arith.constant 1.000000e+00 : f32
    %86 = vector.broadcast %cst_30 : f32 to vector<4x128xf32>
    %87 = arith.maximumf %86, %85 : vector<4x128xf32>
    %88 = vector.broadcast %cst_31 : f32 to vector<4x128xf32>
    %89 = arith.minimumf %88, %87 : vector<4x128xf32>
    %c0_32 = arith.constant 0 : index
    %c0_33 = arith.constant 0 : index
    %90 = vector.load %arg2[%c0_32, %c0_33] : memref<4x128xf32, #tpu.memory_space<vmem>>, vector<4x128xf32>
    tpu.vector_store %arg2[%c0_32, %c0_33], %89 {strides = array<i32>} : memref<4x128xf32, #tpu.memory_space<vmem>>, vector<4x128xf32>,
    %91 = vector.shape_cast %38 : vector<1x128xf32> to vector<1x128xf32>
    %92 = vector.broadcast %91 : vector<1x128xf32> to vector<4x128xf32>
    %c0_34 = arith.constant 0 : index
    %c0_35 = arith.constant 0 : index
    %93 = vector.load %arg3[%c0_34, %c0_35] : memref<4x128xf32, #tpu.memory_space<vmem>>, vector<4x128xf32>
    tpu.vector_store %arg3[%c0_34, %c0_35], %92 {strides = array<i32>} : memref<4x128xf32, #tpu.memory_space<vmem>>, vector<4x128xf32>,
    return
  }
  func.func @transform_0(%arg0: i32) -> (i32, i32, i32) {
    %c0_i32 = arith.constant 0 : i32
    %c0_i32_0 = arith.constant 0 : i32
    %c0_i32_1 = arith.constant 0 : i32
    return %c0_i32, %c0_i32_0, %arg0 : i32, i32, i32
  }
  func.func @transform_1(%arg0: i32) -> (i32, i32) {
    %c0_i32 = arith.constant 0 : i32
    %c0_i32_0 = arith.constant 0 : i32
    return %c0_i32, %arg0 : i32, i32
  }
  func.func @transform_2(%arg0: i32) -> (i32, i32) {
    %c0_i32 = arith.constant 0 : i32
    %c0_i32_0 = arith.constant 0 : i32
    return %c0_i32, %arg0 : i32, i32
  }
}

</mosaic_0001>

<llo_original>
// kernel: tpu_custom_call.1
$region0: #{tpu_custom_call.1}
  #allocation0 [shape = 'u32[]', space=smem, size = 0x4, offset = 0x4, fixed_abs, tag = 'smem constant byte address 0x4 - core index']
  #allocation1 [shape = 'u32[144,128]{1,0:T(1,128)}', space=vmem, size = 0x12000, scoped, tag = 'internal scratch']
  %s0 = inlined_call_operand.hbm [shape: f32[32,4,128], index: 0, kind: input, shape index: {}]
  %s1 = inlined_call_operand.hbm [shape: f32[4,128], index: 1, kind: output, shape index: {0}]
  %s2 = inlined_call_operand.hbm [shape: f32[4,128], index: 2, kind: output, shape index: {1}]
  %3 = xla_tuple %s1, %s2
  %s4 = sld [smem:[#allocation0]]
  $region26: #{tpu_custom_call.1} parent=0
    _
  %s6 = ssub.s32 1, %s4
  %s7 = scalar_select 0, %s6, %s4
  $region1: #{tpu_custom_call.1} parent=0
    #allocation2 [shape = 'u8[65536]{0}', space=vmem, size = 0x10000, scoped, tag = 'input window, operand 0, single buffered']
    #allocation3 [shape = 's32[1]{0}', space=sflag, size = 0x4, scoped, tag = 'scoped memory for tpu_custom_call.1']
    #allocation4 [shape = 's32[1]{0}', space=sflag, size = 0x4, scoped, tag = 'scoped memory for tpu_custom_call.1']
    #allocation5 [shape = 'u8[2048]{0}', space=vmem, size = 0x800, scoped, tag = 'output window, operand 0, single buffered']
    #allocation6 [shape = 'u8[2048]{0}', space=vmem, size = 0x800, scoped, tag = 'output window, operand 1, single buffered']
    #allocation7 [shape = 's32[1]{0}', space=sflag, size = 0x4, scoped, tag = 'scoped memory for tpu_custom_call.1']
    %8 = vsyncpa [#allocation3], 0
    %9 = vsyncpa [#allocation4], 0
    %10 = vsyncpa [#allocation7], 0
    // Predicated region
    $region2: #{tpu_custom_call.1} parent=1 // pred_check
      _
    $region3: #{tpu_custom_call.1} parent=1 // pred_check_branch
      %12 = sbr.rel (0) target = $region5
    $region4: #{tpu_custom_call.1} parent=1 // pred_region
      %s14 = ssub.s32 2048, 2048
      %15 = vsyncadd [#allocation3], %s14
      %s16 = sshll.u32 [#allocation2], 4
      %s17 = int_to_ptr.vmem [resolvable:$true] %s16
      %22 = dma.hbm_to_vmem [thread:$0]  %s0, 2048, %s17, [#allocation3], 64, 64, 4
    $region5: #{tpu_custom_call.1} parent=1 // pred_fallthru
      _
    // Predicated region
    $region6: #{tpu_custom_call.1} parent=1 // pred_check
      _
    $region7: #{tpu_custom_call.1} parent=1 // pred_check_branch
      %24 = sbr.rel (0) target = $region9
    $region8: #{tpu_custom_call.1} parent=1 // pred_region
      %25 = dma.done [#allocation3], 2048
    $region9: #{tpu_custom_call.1} parent=1 // pred_fallthru
      _
    %v26 = vld [vmem:[#allocation2] sm:$0xf]
    %v27 = vld [vmem:[#allocation2 + $0x4] sm:$0xf]
    %v28 = vld [vmem:[#allocation2 + $0x8] sm:$0xf]
    %v29 = vld [vmem:[#allocation2 + $0xc] sm:$0xf]
    %v30 = vld [vmem:[#allocation2 + $0x10] sm:$0xf]
    %v31 = vld [vmem:[#allocation2 + $0x14] sm:$0xf]
    %v32 = vld [vmem:[#allocation2 + $0x18] sm:$0xf]
    %v33 = vld [vmem:[#allocation2 + $0x1c] sm:$0xf]
    %v34 = vld [vmem:[#allocation2 + $0x20] sm:$0xf]
    %v35 = vld [vmem:[#allocation2 + $0x24] sm:$0xf]
    %v36 = vld [vmem:[#allocation2 + $0x28] sm:$0xf]
    %v37 = vld [vmem:[#allocation2 + $0x2c] sm:$0xf]
    %v38 = vld [vmem:[#allocation2 + $0x30] sm:$0xf]
    %v39 = vld [vmem:[#allocation2 + $0x34] sm:$0xf]
    %v40 = vld [vmem:[#allocation2 + $0x38] sm:$0xf]
    %v41 = vld [vmem:[#allocation2 + $0x3c] sm:$0xf]
    %v42 = vld [vmem:[#allocation2 + $0x40] sm:$0xf]
    %v43 = vld [vmem:[#allocation2 + $0x44] sm:$0xf]
    %v44 = vld [vmem:[#allocation2 + $0x48] sm:$0xf]
    %v45 = vld [vmem:[#allocation2 + $0x4c] sm:$0xf]
    %v46 = vld [vmem:[#allocation2 + $0x50] sm:$0xf]
    %v47 = vld [vmem:[#allocation2 + $0x54] sm:$0xf]
    %v48 = vld [vmem:[#allocation2 + $0x58] sm:$0xf]
    %v49 = vld [vmem:[#allocation2 + $0x5c] sm:$0xf]
    %v50 = vld [vmem:[#allocation2 + $0x60] sm:$0xf]
    %v51 = vld [vmem:[#allocation2 + $0x64] sm:$0xf]
    %v52 = vld [vmem:[#allocation2 + $0x68] sm:$0xf]
    %v53 = vld [vmem:[#allocation2 + $0x6c] sm:$0xf]
    %v54 = vld [vmem:[#allocation2 + $0x70] sm:$0xf]
    %v55 = vld [vmem:[#allocation2 + $0x74] sm:$0xf]
    %v56 = vld [vmem:[#allocation2 + $0x78] sm:$0xf]
    %v57 = vld [vmem:[#allocation2 + $0x7c] sm:$0xf]
    %v58 = vmul.f32 %v26, %v26
    %v59 = vmul.f32 %v27, %v27
    %v60 = vmul.f32 %v28, %v28
    %v61 = vmul.f32 %v29, %v29
    %v62 = vmul.f32 %v30, %v30
    %v63 = vmul.f32 %v31, %v31
    %v64 = vmul.f32 %v32, %v32
    %v65 = vmul.f32 %v33, %v33
    %v66 = vmul.f32 %v34, %v34
    %v67 = vmul.f32 %v35, %v35
    %v68 = vmul.f32 %v36, %v36
    %v69 = vmul.f32 %v37, %v37
    %v70 = vmul.f32 %v38, %v38
    %v71 = vmul.f32 %v39, %v39
    %v72 = vmul.f32 %v40, %v40
    %v73 = vmul.f32 %v41, %v41
    %v74 = vmul.f32 %v42, %v42
    %v75 = vmul.f32 %v43, %v43
    %v76 = vmul.f32 %v44, %v44
    %v77 = vmul.f32 %v45, %v45
    %v78 = vmul.f32 %v46, %v46
    %v79 = vmul.f32 %v47, %v47
    %v80 = vmul.f32 %v48, %v48
    %v81 = vmul.f32 %v49, %v49
    %v82 = vmul.f32 %v50, %v50
    %v83 = vmul.f32 %v51, %v51
    %v84 = vmul.f32 %v52, %v52
    %v85 = vmul.f32 %v53, %v53
    %v86 = vmul.f32 %v54, %v54
    %v87 = vmul.f32 %v55, %v55
    %v88 = vmul.f32 %v56, %v56
    %v89 = vmul.f32 %v57, %v57
    %vm90 = vcmask 1043456
    %v91 = vsel %vm90, %v58, 0.0
    %v92 = vsel %vm90, %v59, 0.0
    %v93 = vadd.f32 %v91, %v92
    %v94 = vsel %vm90, %v60, 0.0
    %v95 = vadd.f32 %v93, %v94
    %v96 = vsel %vm90, %v61, 0.0
    %v97 = vadd.f32 %v95, %v96
    %v98 = vsel %vm90, %v62, 0.0
    %v99 = vadd.f32 %v97, %v98
    %v100 = vsel %vm90, %v63, 0.0
    %v101 = vadd.f32 %v99, %v100
    %v102 = vsel %vm90, %v64, 0.0
    %v103 = vadd.f32 %v101, %v102
    %v104 = vsel %vm90, %v65, 0.0
    %v105 = vadd.f32 %v103, %v104
    %v106 = vsel %vm90, %v66, 0.0
    %v107 = vadd.f32 %v105, %v106
    %v108 = vsel %vm90, %v67, 0.0
    %v109 = vadd.f32 %v107, %v108
    %v110 = vsel %vm90, %v68, 0.0
    %v111 = vadd.f32 %v109, %v110
    %v112 = vsel %vm90, %v69, 0.0
    %v113 = vadd.f32 %v111, %v112
    %v114 = vsel %vm90, %v70, 0.0
    %v115 = vadd.f32 %v113, %v114
    %v116 = vsel %vm90, %v71, 0.0
    %v117 = vadd.f32 %v115, %v116
    %v118 = vsel %vm90, %v72, 0.0
    %v119 = vadd.f32 %v117, %v118
    %v120 = vsel %vm90, %v73, 0.0
    %v121 = vadd.f32 %v119, %v120
    %v122 = vsel %vm90, %v74, 0.0
    %v123 = vadd.f32 %v121, %v122
    %v124 = vsel %vm90, %v75, 0.0
    %v125 = vadd.f32 %v123, %v124
    %v126 = vsel %vm90, %v76, 0.0
    %v127 = vadd.f32 %v125, %v126
    %v128 = vsel %vm90, %v77, 0.0
    %v129 = vadd.f32 %v127, %v128
    %v130 = vsel %vm90, %v78, 0.0
    %v131 = vadd.f32 %v129, %v130
    %v132 = vsel %vm90, %v79, 0.0
    %v133 = vadd.f32 %v131, %v132
    %v134 = vsel %vm90, %v80, 0.0
    %v135 = vadd.f32 %v133, %v134
    %v136 = vsel %vm90, %v81, 0.0
    %v137 = vadd.f32 %v135, %v136
    %v138 = vsel %vm90, %v82, 0.0
    %v139 = vadd.f32 %v137, %v138
    %v140 = vsel %vm90, %v83, 0.0
    %v141 = vadd.f32 %v139, %v140
    %v142 = vsel %vm90, %v84, 0.0
    %v143 = vadd.f32 %v141, %v142
    %v144 = vsel %vm90, %v85, 0.0
    %v145 = vadd.f32 %v143, %v144
    %v146 = vsel %vm90, %v86, 0.0
    %v147 = vadd.f32 %v145, %v146
    %v148 = vsel %vm90, %v87, 0.0
    %v149 = vadd.f32 %v147, %v148
    %v150 = vsel %vm90, %v88, 0.0
    %v151 = vadd.f32 %v149, %v150
    %v152 = vsel %vm90, %v89, 0.0
    %v153 = vadd.f32 %v151, %v152
    %v154 = vlaneseq
    %v155 = vshrl.u32 %v154, 7
    %v156 = vsub.s32 0, %v155
    %v157 = vrot.slane %v26, %v156
    %v158 = vlaneseq
    %v159 = vshrl.u32 %v158, 7
    %v160 = vsub.s32 0, %v159
    %v161 = vrot.slane %v27, %v160
    %v162 = vlaneseq
    %v163 = vshrl.u32 %v162, 7
    %v164 = vsub.s32 0, %v163
    %v165 = vrot.slane %v28, %v164
    %v166 = vlaneseq
    %v167 = vshrl.u32 %v166, 7
    %v168 = vsub.s32 0, %v167
    %v169 = vrot.slane %v29, %v168
    %v170 = vlaneseq
    %v171 = vshrl.u32 %v170, 7
    %v172 = vsub.s32 0, %v171
    %v173 = vrot.slane %v30, %v172
    %v174 = vlaneseq
    %v175 = vshrl.u32 %v174, 7
    %v176 = vsub.s32 0, %v175
    %v177 = vrot.slane %v31, %v176
    %v178 = vlaneseq
    %v179 = vshrl.u32 %v178, 7
    %v180 = vsub.s32 0, %v179
    %v181 = vrot.slane %v32, %v180
    %v182 = vlaneseq
    %v183 = vshrl.u32 %v182, 7
    %v184 = vsub.s32 0, %v183
    %v185 = vrot.slane %v33, %v184
    %v186 = vlaneseq
    %v187 = vshrl.u32 %v186, 7
    %v188 = vsub.s32 0, %v187
    %v189 = vrot.slane %v34, %v188
    %v190 = vlaneseq
    %v191 = vshrl.u32 %v190, 7
    %v192 = vsub.s32 0, %v191
    %v193 = vrot.slane %v35, %v192
    %v194 = vlaneseq
    %v195 = vshrl.u32 %v194, 7
    %v196 = vsub.s32 0, %v195
    %v197 = vrot.slane %v36, %v196
    %v198 = vlaneseq
    %v199 = vshrl.u32 %v198, 7
    %v200 = vsub.s32 0, %v199
    %v201 = vrot.slane %v37, %v200
    %v202 = vlaneseq
    %v203 = vshrl.u32 %v202, 7
    %v204 = vsub.s32 0, %v203
    %v205 = vrot.slane %v38, %v204
    %v206 = vlaneseq
    %v207 = vshrl.u32 %v206, 7
    %v208 = vsub.s32 0, %v207
    %v209 = vrot.slane %v39, %v208
    %v210 = vlaneseq
    %v211 = vshrl.u32 %v210, 7
    %v212 = vsub.s32 0, %v211
    %v213 = vrot.slane %v40, %v212
    %v214 = vlaneseq
    %v215 = vshrl.u32 %v214, 7
    %v216 = vsub.s32 0, %v215
    %v217 = vrot.slane %v41, %v216
    %v218 = vlaneseq
    %v219 = vshrl.u32 %v218, 7
    %v220 = vsub.s32 0, %v219
    %v221 = vrot.slane %v42, %v220
    %v222 = vlaneseq
    %v223 = vshrl.u32 %v222, 7
    %v224 = vsub.s32 0, %v223
    %v225 = vrot.slane %v43, %v224
    %v226 = vlaneseq
    %v227 = vshrl.u32 %v226, 7
    %v228 = vsub.s32 0, %v227
    %v229 = vrot.slane %v44, %v228
    %v230 = vlaneseq
    %v231 = vshrl.u32 %v230, 7
    %v232 = vsub.s32 0, %v231
    %v233 = vrot.slane %v45, %v232
    %v234 = vlaneseq
    %v235 = vshrl.u32 %v234, 7
    %v236 = vsub.s32 0, %v235
    %v237 = vrot.slane %v46, %v236
    %v238 = vlaneseq
    %v239 = vshrl.u32 %v238, 7
    %v240 = vsub.s32 0, %v239
    %v241 = vrot.slane %v47, %v240
    %v242 = vlaneseq
    %v243 = vshrl.u32 %v242, 7
    %v244 = vsub.s32 0, %v243
    %v245 = vrot.slane %v48, %v244
    %v246 = vlaneseq
    %v247 = vshrl.u32 %v246, 7
    %v248 = vsub.s32 0, %v247
    %v249 = vrot.slane %v49, %v248
    %v250 = vlaneseq
    %v251 = vshrl.u32 %v250, 7
    %v252 = vsub.s32 0, %v251
    %v253 = vrot.slane %v50, %v252
    %v254 = vlaneseq
    %v255 = vshrl.u32 %v254, 7
    %v256 = vsub.s32 0, %v255
    %v257 = vrot.slane %v51, %v256
    %v258 = vlaneseq
    %v259 = vshrl.u32 %v258, 7
    %v260 = vsub.s32 0, %v259
    %v261 = vrot.slane %v52, %v260
    %v262 = vlaneseq
    %v263 = vshrl.u32 %v262, 7
    %v264 = vsub.s32 0, %v263
    %v265 = vrot.slane %v53, %v264
    %v266 = vlaneseq
    %v267 = vshrl.u32 %v266, 7
    %v268 = vsub.s32 0, %v267
    %v269 = vrot.slane %v54, %v268
    %v270 = vlaneseq
    %v271 = vshrl.u32 %v270, 7
    %v272 = vsub.s32 0, %v271
    %v273 = vrot.slane %v55, %v272
    %v274 = vlaneseq
    %v275 = vshrl.u32 %v274, 7
    %v276 = vsub.s32 0, %v275
    %v277 = vrot.slane %v56, %v276
    %v278 = vlaneseq
    %v279 = vshrl.u32 %v278, 7
    %v280 = vsub.s32 0, %v279
    %v281 = vrot.slane %v57, %v280
    %v282 = vmul.f32 %v157, %v26
    %v283 = vmul.f32 %v161, %v27
    %v284 = vmul.f32 %v165, %v28
    %v285 = vmul.f32 %v169, %v29
    %v286 = vmul.f32 %v173, %v30
    %v287 = vmul.f32 %v177, %v31
    %v288 = vmul.f32 %v181, %v32
    %v289 = vmul.f32 %v185, %v33
    %v290 = vmul.f32 %v189, %v34
    %v291 = vmul.f32 %v193, %v35
    %v292 = vmul.f32 %v197, %v36
    %v293 = vmul.f32 %v201, %v37
    %v294 = vmul.f32 %v205, %v38
    %v295 = vmul.f32 %v209, %v39
    %v296 = vmul.f32 %v213, %v40
    %v297 = vmul.f32 %v217, %v41
    %v298 = vmul.f32 %v221, %v42
    %v299 = vmul.f32 %v225, %v43
    %v300 = vmul.f32 %v229, %v44
    %v301 = vmul.f32 %v233, %v45
    %v302 = vmul.f32 %v237, %v46
    %v303 = vmul.f32 %v241, %v47
    %v304 = vmul.f32 %v245, %v48
    %v305 = vmul.f32 %v249, %v49
    %v306 = vmul.f32 %v253, %v50
    %v307 = vmul.f32 %v257, %v51
    %v308 = vmul.f32 %v261, %v52
    %v309 = vmul.f32 %v265, %v53
    %v310 = vmul.f32 %v269, %v54
    %v311 = vmul.f32 %v273, %v55
    %v312 = vmul.f32 %v277, %v56
    %v313 = vmul.f32 %v281, %v57
    %v314 = vsel %vm90, %v282, 0.0
    %v315 = vsel %vm90, %v283, 0.0
    %v316 = vadd.f32 %v314, %v315
    %v317 = vsel %vm90, %v284, 0.0
    %v318 = vadd.f32 %v316, %v317
    %v319 = vsel %vm90, %v285, 0.0
    %v320 = vadd.f32 %v318, %v319
    %v321 = vsel %vm90, %v286, 0.0
    %v322 = vadd.f32 %v320, %v321
    %v323 = vsel %vm90, %v287, 0.0
    %v324 = vadd.f32 %v322, %v323
    %v325 = vsel %vm90, %v288, 0.0
    %v326 = vadd.f32 %v324, %v325
    %v327 = vsel %vm90, %v289, 0.0
    %v328 = vadd.f32 %v326, %v327
    %v329 = vsel %vm90, %v290, 0.0
    %v330 = vadd.f32 %v328, %v329
    %v331 = vsel %vm90, %v291, 0.0
    %v332 = vadd.f32 %v330, %v331
    %v333 = vsel %vm90, %v292, 0.0
    %v334 = vadd.f32 %v332, %v333
    %v335 = vsel %vm90, %v293, 0.0
    %v336 = vadd.f32 %v334, %v335
    %v337 = vsel %vm90, %v294, 0.0
    %v338 = vadd.f32 %v336, %v337
    %v339 = vsel %vm90, %v295, 0.0
    %v340 = vadd.f32 %v338, %v339
    %v341 = vsel %vm90, %v296, 0.0
    %v342 = vadd.f32 %v340, %v341
    %v343 = vsel %vm90, %v297, 0.0
    %v344 = vadd.f32 %v342, %v343
    %v345 = vsel %vm90, %v298, 0.0
    %v346 = vadd.f32 %v344, %v345
    %v347 = vsel %vm90, %v299, 0.0
    %v348 = vadd.f32 %v346, %v347
    %v349 = vsel %vm90, %v300, 0.0
    %v350 = vadd.f32 %v348, %v349
    %v351 = vsel %vm90, %v301, 0.0
    %v352 = vadd.f32 %v350, %v351
    %v353 = vsel %vm90, %v302, 0.0
    %v354 = vadd.f32 %v352, %v353
    %v355 = vsel %vm90, %v303, 0.0
    %v356 = vadd.f32 %v354, %v355
    %v357 = vsel %vm90, %v304, 0.0
    %v358 = vadd.f32 %v356, %v357
    %v359 = vsel %vm90, %v305, 0.0
    %v360 = vadd.f32 %v358, %v359
    %v361 = vsel %vm90, %v306, 0.0
    %v362 = vadd.f32 %v360, %v361
    %v363 = vsel %vm90, %v307, 0.0
    %v364 = vadd.f32 %v362, %v363
    %v365 = vsel %vm90, %v308, 0.0
    %v366 = vadd.f32 %v364, %v365
    %v367 = vsel %vm90, %v309, 0.0
    %v368 = vadd.f32 %v366, %v367
    %v369 = vsel %vm90, %v310, 0.0
    %v370 = vadd.f32 %v368, %v369
    %v371 = vsel %vm90, %v311, 0.0
    %v372 = vadd.f32 %v370, %v371
    %v373 = vsel %vm90, %v312, 0.0
    %v374 = vadd.f32 %v372, %v373
    %v375 = vsel %vm90, %v313, 0.0
    %v376 = vadd.f32 %v374, %v375
    %vm377 = vcmp.gt.f32.partialorder %v153, 0.99998
    %v378 = vmax.f32 %v153, 1e-30
    %v379 = vrsqrt.pop %v378
    %v380 = vmul.f32 %v379, 0.99999
    %v381 = vsel %vm377, %v380, 1.0
    %v382 = vmin.f32 %v153, 0.99998
    %v383 = vlaneseq
    %v384 = vshrl.u32 %v383, 7
    %v385 = vsub.s32 0, %v384
    %v386 = vrot.slane %v381, %v385
    %v387 = vmul.f32 %v386, %v381
    %v388 = vmul.f32 %v376, %v387
    %v389 = vrsqrt.pop %v382
    %v390 = vmul.f32 %v382, %v389
    %vm391 = vcmp.eq.f32.partialorder %v382, inf
    %v392 = vsel %vm391, %v382, %v390
    %vm393 = vcmp.eq.f32.partialorder %v382, 0.0
    %v394 = vand.u32 %v382, 2147483648
    %v395 = vsel %vm393, %v394, %v392
    %v396 = vmax.f32 %v395, 1e-15
    %v397 = vsub.f32 1.0, %v382
    %v398 = vmul.f32 %v397, 0.060174704
    %v399 = vrcp.pop %v396
    %v400 = vmul.f32 %v398, %v399
    %v401 = vmax.f32 %v400, -1.0
    %v402 = vmin.f32 %v401, 1.0
    %v403 = vlaneseq
    %v404 = vshrl.u32 %v403, 7
    %v405 = vsub.s32 0, %v404
    %v406 = vrot.slane %v382, %v405
    %v407 = vadd.f32 %v406, %v382
    %v408 = vmul.f32 %v388, 2.0
    %v409 = vsub.f32 %v407, %v408
    %v410 = vmax.f32 %v409, 0.0
    %v411 = vmul.f32 %v406, %v382
    %v412 = vadd.f32 %v411, 1.0
    %v413 = vsub.f32 %v412, %v408
    %v414 = vmax.f32 %v413, 1e-30
    %v415 = vadd.f32 %v382, 1.0
    %v416 = vlaneseq
    %v417 = vshrl.u32 %v416, 7
    %v418 = vsub.s32 0, %v417
    %v419 = vrot.slane %v415, %v418
    %v420 = vmul.f32 %v388, %v419
    %v421 = vmul.f32 %v406, %v415
    %v422 = vsub.f32 %v420, %v421
    %v423 = vrsqrt.pop %v410
    %v424 = vmul.f32 %v410, %v423
    %vm425 = vcmp.eq.f32.partialorder %v410, inf
    %v426 = vsel %vm425, %v410, %v424
    %vm427 = vcmp.eq.f32.partialorder %v410, 0.0
    %v428 = vand.u32 %v410, 2147483648
    %v429 = vsel %vm427, %v428, %v426
    %v430 = vmax.f32 %v429, 1e-15
    %v431 = vlaneseq
    %v432 = vshrl.u32 %v431, 7
    %v433 = vsub.s32 0, %v432
    %v434 = vrot.slane %v396, %v433
    %v435 = vmul.f32 %v434, %v430
    %v436 = vrsqrt.pop %v414
    %v437 = vmul.f32 %v414, %v436
    %vm438 = vcmp.eq.f32.partialorder %v414, inf
    %v439 = vsel %vm438, %v414, %v437
    %vm440 = vcmp.eq.f32.partialorder %v414, 0.0
    %v441 = vand.u32 %v414, 2147483648
    %v442 = vsel %vm440, %v441, %v439
    %v443 = vmul.f32 %v435, %v442
    %v444 = vmax.f32 %v443, 1e-15
    %v445 = vrcp.pop %v444
    %v446 = vmul.f32 %v422, %v445
    %v447 = vmax.f32 %v446, -1.0
    %v448 = vmin.f32 %v447, 1.0
    %449 = vst [vmem:[#allocation5] sm:$0xf] %v448
    %v450 = vlaneseq
    %v451 = vshrl.u32 %v450, 7
    %v452 = vsub.s32 0, %v451
    %v453 = vrot.slane %v402, %v452
    %454 = vst [vmem:[#allocation6] sm:$0xf] %v453
    // Predicated region
    $region10: #{tpu_custom_call.1} parent=1 // pred_check
      _
    $region11: #{tpu_custom_call.1} parent=1 // pred_check_branch
      %456 = sbr.rel (0) target = $region13
    $region12: #{tpu_custom_call.1} parent=1 // pred_region
      %s458 = ssub.s32 64, 64
      %459 = vsyncadd [#allocation4], %s458
      %s461 = sshll.u32 [#allocation5], 4
      %s462 = int_to_ptr.vmem [resolvable:$true] %s461
      %464 = dma.vmem_to_hbm [thread:$0]  %s462, 64, %s1, [#allocation4]
    $region13: #{tpu_custom_call.1} parent=1 // pred_fallthru
      _
    // Predicated region
    $region14: #{tpu_custom_call.1} parent=1 // pred_check
      _
    $region15: #{tpu_custom_call.1} parent=1 // pred_check_branch
      %466 = sbr.rel (0) target = $region17
    $region16: #{tpu_custom_call.1} parent=1 // pred_region
      %s468 = ssub.s32 64, 64
      %469 = vsyncadd [#allocation7], %s468
      %s471 = sshll.u32 [#allocation6], 4
      %s472 = int_to_ptr.vmem [resolvable:$true] %s471
      %474 = dma.vmem_to_hbm [thread:$0]  %s472, 64, %s2, [#allocation7]
    $region17: #{tpu_custom_call.1} parent=1 // pred_fallthru
      _
    // Predicated region
    $region18: #{tpu_custom_call.1} parent=1 // pred_check
      _
    $region19: #{tpu_custom_call.1} parent=1 // pred_check_branch
      %476 = sbr.rel (0) target = $region21
    $region20: #{tpu_custom_call.1} parent=1 // pred_region
      %477 = dma.done [#allocation4], 64
    $region21: #{tpu_custom_call.1} parent=1 // pred_fallthru
      _
    // Predicated region
    $region22: #{tpu_custom_call.1} parent=1 // pred_check
      _
    $region23: #{tpu_custom_call.1} parent=1 // pred_check_branch
      %479 = sbr.rel (0) target = $region25
    $region24: #{tpu_custom_call.1} parent=1 // pred_region
      %480 = dma.done [#allocation7], 64
    $region25: #{tpu_custom_call.1} parent=1 // pred_fallthru
      _
    %481 = vsyncpa [#allocation3], 1
    %482 = vsyncpa [#allocation4], 1
    %483 = vsyncpa [#allocation7], 1

</llo_original>
